<compile_context>
chip_gen: v6e
topology: v6e:2x2x1
jax: 0.10.0
libtpu: 0.0.40
codegen_flags: <defaults>
</compile_context>

<pallas_src>
import functools

import jax
import jax.numpy as jnp
from jax import lax
from jax.experimental import pallas as pl
from jax.experimental.pallas import tpu as pltpu

# ---------------- config ----------------
PERIOD = 8
MPD_BLOCKS = 3
MPD_IN_CH = [1, 4, 8]
MPD_OUT_CH = [4, 8, 8]
MPD_KERNEL = 5          # kernel height (width is 1)
MPD_STRIDE = [3, 2, 1]  # stride along height (width stride is 1)
MPD_OUT_KERNEL = 3      # final conv kernel height (width 1)
LEAKY = 0.1

ROW_BLOCK = 8           # f32 sublane tile: one grid step = one (8, N) row block
LANE = 128              # lane width: output slab padded to a multiple of this


def get_padding(k, d=1):
    return (k * d - d) // 2


def _round_up(n, m):
    return ((n + m - 1) // m) * m


# ---------------- fused Pallas kernel: all conv layers, one lane-dense output slab ------
def _fused_mpd_kernel(x_ref, *rest, num_layers, acts, leaky, offsets, widths, n_slab):
    """rest = [T_0, b_0, ..., T_{L-1}, b_{L-1}, out].

    x_ref : (ROW_BLOCK, H0*C0)  framed input rows (row = (batch, period-phase))
    T_l   : (N_in_l, N_out_l)   W-folded dense conv matrix (tiny, kernel-width-1 conv)
    b_l   : (1, N_out_l)        bias tiled over H_out positions (broadcast over rows)
    out   : (ROW_BLOCK, n_slab) lane-dense slab holding every layer's features at
                                lane offset offsets[l]  (single unmasked full-width store)
    """
    w_refs = rest[:2 * num_layers]
    out_ref = rest[2 * num_layers]
    rows = x_ref.shape[0]

    a = x_ref[...]                                    # (rows, N_in_0), f32, stays in VMEM
    slab = jnp.zeros((rows, n_slab), jnp.float32)
    for l in range(num_layers):
        t = w_refs[2 * l][...]
        b = w_refs[2 * l + 1][...]
        # Lane-dense matmul on the MXU, f32 accumulation (f32 operands kept to meet the
        # 1e-4 check against the XLA conv reference).
        a = jnp.dot(a, t, preferred_element_type=jnp.float32) + b
        if acts[l]:
            a = jnp.where(a >= 0.0, a, leaky * a)     # LeakyReLU
        # Place this layer's features at a static lane offset of the output slab via a
        # tiny 0/1 matrix built from iota (exact, MXU has slack) — avoids unaligned lane
        # concatenation and masked partial stores.
        n = widths[l]
        lane_idx = lax.broadcasted_iota(jnp.int32, (n, n_slab), 1)
        col_idx = lax.broadcasted_iota(jnp.int32, (n, n_slab), 0)
        place = jnp.where(lane_idx == col_idx + offsets[l], 1.0, 0.0).astype(jnp.float32)
        slab = slab + jnp.dot(a, place, preferred_element_type=jnp.float32)
    out_ref[...] = slab                               # one unmasked (8, n_slab) store


def fused_forward(frames, dense_layers, n_slab):
    """frames: (M, H0*C0) f32 with M % ROW_BLOCK == 0.  Returns the (M, n_slab) slab."""
    m, n0 = frames.shape
    assert m % ROW_BLOCK == 0
    num_layers = len(dense_layers)

    args = [frames]
    in_specs = [pl.BlockSpec((ROW_BLOCK, n0), lambda i: (i, 0))]
    for d in dense_layers:
        args.extend([d["t"], d["b"]])
        # Full (tiny, ~KB) weight/bias blocks; same block index every grid step.
        # (Default double-buffering of these is a few KB — pl.Buffered(1) not needed here.)
        in_specs.append(pl.BlockSpec(d["t"].shape, lambda i: (0, 0)))
        in_specs.append(pl.BlockSpec(d["b"].shape, lambda i: (0, 0)))

    kernel = functools.partial(
        _fused_mpd_kernel,
        num_layers=num_layers,
        acts=tuple(bool(d["act"]) for d in dense_layers),
        leaky=LEAKY,
        offsets=tuple(d["off"] for d in dense_layers),
        widths=tuple(d["n_pad"] for d in dense_layers),
        n_slab=n_slab,
    )

    return pl.pallas_call(
        kernel,
        out_shape=jax.ShapeDtypeStruct((m, n_slab), jnp.float32),
        grid=(m // ROW_BLOCK,),               # 8-row blocks; disjoint outputs
        in_specs=in_specs,
        out_specs=pl.BlockSpec((ROW_BLOCK, n_slab), lambda i: (i, 0)),
        compiler_params=pltpu.CompilerParams(
            dimension_semantics=("parallel",)),   # lets v7x use both TensorCores
    )(*args)


# ---------------- one-time parameter preparation (plain JAX, outside kernel) ----
def weight_norm_w(v, g):
    norm = jnp.sqrt(jnp.sum(v * v, axis=(1, 2, 3), keepdims=True))
    return g.reshape(-1, 1, 1, 1) * v / norm


def init_params(key):
    layers = []
    for i in range(MPD_BLOCKS):
        key, kv, kg, kb = jax.random.split(key, 4)
        cin, cout = MPD_IN_CH[i], MPD_OUT_CH[i]
        v = jax.random.normal(kv, (cout, cin, MPD_KERNEL, 1), jnp.float32) * 0.2
        g = 0.5 + jax.random.uniform(kg, (cout,), jnp.float32)
        b = jax.random.normal(kb, (cout,), jnp.float32) * 0.05
        layers.append(dict(w=weight_norm_w(v, g), b=b, stride=MPD_STRIDE[i],
                           pad=get_padding(MPD_KERNEL, 1), act=True))
    # final conv: Cout -> 1, kernel (3,1), stride 1, no padding, no activation
    key, kv, kg, kb = jax.random.split(key, 4)
    v = jax.random.normal(kv, (1, MPD_OUT_CH[-1], MPD_OUT_KERNEL, 1), jnp.float32) * 0.2
    g = 0.5 + jax.random.uniform(kg, (1,), jnp.float32)
    b = jax.random.normal(kb, (1,), jnp.float32) * 0.05
    layers.append(dict(w=weight_norm_w(v, g), b=b, stride=1, pad=0, act=False))
    return layers


def conv_as_dense(w, H_in, stride, pad):
    """Kernel-width-1 Conv2d -> dense (H_in*Cin, H_out*Cout) matrix acting on the
    W-folded feature (row = (batch, width), col order = (h, c))."""
    Cout, Cin, K, _ = w.shape
    H_out = (H_in + 2 * pad - K) // stride + 1
    hi = jnp.arange(H_in).reshape(H_in, 1, 1)
    ho = jnp.arange(H_out).reshape(1, H_out, 1)
    kk = jnp.arange(K).reshape(1, 1, K)
    # sel[hi, ho, k] = 1 iff input row hi feeds output row ho through tap k
    sel = (hi == ho * stride + kk - pad).astype(jnp.float32)       # (H_in, H_out, K)
    wk = w[:, :, :, 0]                                             # (Cout, Cin, K)
    t = jnp.einsum("iok,cxk->ixoc", sel, wk)                       # (H_in, Cin, H_out, Cout)
    return t.reshape(H_in * Cin, H_out * Cout), H_out


def prepare_dense_layers(layers, H0):
    """Per-layer dense conv matrices + tiled biases, specialized to the framed height H0.
    Each layer's output width is rounded up to a multiple of 8 (extra all-zero columns /
    zero bias), and the next layer's matrix gets matching zero rows — keeps every matmul
    contraction >= 8 and every slab offset sublane-friendly."""
    dense = []
    H = H0
    carry_pad = 0      # zero rows to append because the previous layer's output was padded
    off = 0
    for lyr in layers:
        w, b = lyr["w"], lyr["b"]
        Cout = w.shape[0]
        t, Ho = conv_as_dense(w, H, lyr["stride"], lyr["pad"])
        n_real = Ho * Cout
        n_pad = _round_up(n_real, 8)
        t = jnp.pad(t, ((0, carry_pad), (0, n_pad - n_real)))
        b_big = jnp.pad(jnp.tile(b, Ho), (0, n_pad - n_real)).reshape(1, n_pad)
        dense.append(dict(t=t, b=b_big, act=lyr["act"], H_out=Ho, C_out=Cout,
                          n_real=n_real, n_pad=n_pad, off=off))
        off += n_pad
        carry_pad = n_pad - n_real
        H = Ho
    n_slab = _round_up(max(off, LANE), LANE)
    return dense, n_slab


# ---------------- forward ----------------
def sub_mpd_forward(x, layers, p):
    """x: (B, C, T). Returns (flat(last feature, dims 1..), [features in NCHW])."""
    B, C, T = x.shape
    pad = p - T % p  # matches the PyTorch forward exactly (full period if T % p == 0)
    xpad = jnp.pad(x, ((0, 0), (0, 0), (0, pad)), mode="reflect")
    H0 = (T + pad) // p

    # Dense matrices depend on H0 -> rebuild per call (cheap; a few KB of host-side JAX).
    dense, n_slab = prepare_dense_layers(layers, H0)

    # W-fold: GEMM rows = (batch, period-phase w), GEMM cols = (frame h, channel c).
    frames = xpad.reshape(B, C, H0, p).transpose(0, 3, 2, 1).reshape(B * p, H0 * C)
    M = B * p
    M_pad = _round_up(M, ROW_BLOCK)
    if M_pad != M:
        frames = jnp.pad(frames, ((0, M_pad - M), (0, 0)))

    slab = fused_forward(frames, dense, n_slab)[:M]     # (B*p, n_slab)

    features = []
    for d in dense:
        Ho, Cout, off = d["H_out"], d["C_out"], d["off"]
        blk = slab[:, off:off + Ho * Cout]               # (B*p, Ho*Cout), col order (h, c)
        features.append(blk.reshape(B, p, Ho, Cout).transpose(0, 3, 2, 1))  # NCHW
    flat = features[-1].reshape(B, -1)
    return flat, features


# ---------------- pure-JAX reference (for validation only) ----------------
def ref_forward(x, layers, p):
    B, C, T = x.shape
    pad = p - T % p
    xpad = jnp.pad(x, ((0, 0), (0, 0), (0, pad)), mode="reflect")
    out = xpad.reshape(B, C, -1, p)
    feats = []
    for lyr in layers:
        out = lax.conv_general_dilated(
            out, lyr["w"], window_strides=(lyr["stride"], 1),
            padding=((lyr["pad"], lyr["pad"]), (0, 0)),
            dimension_numbers=("NCHW", "OIHW", "NCHW"),
        ) + lyr["b"].reshape(1, -1, 1, 1)
        if lyr["act"]:
            out = jnp.where(out >= 0.0, out, LEAKY * out)
        feats.append(out)
    return feats[-1].reshape(B, -1), feats


if __name__ == "__main__":
    key = jax.random.PRNGKey(0)
    key, kx = jax.random.split(key)

    B, C, T = 2, 1, 125  # T % PERIOD = 5 -> reflect-pad 3 -> 128 samples = 16 frames of 8
    x = jax.random.normal(kx, (B, C, T), jnp.float32)

    layers = init_params(key)

    flat, feats = sub_mpd_forward(x, layers, PERIOD)
    flat = jax.block_until_ready(flat)
    feats = jax.block_until_ready(feats)

    flat_ref, feats_ref = ref_forward(x, layers, PERIOD)
    assert flat.shape == flat_ref.shape
    assert all(a.shape == b.shape for a, b in zip(feats, feats_ref))
    assert jnp.allclose(flat, flat_ref, rtol=1e-4, atol=1e-4)
    for a, b in zip(feats, feats_ref):
        assert jnp.allclose(a, b, rtol=1e-4, atol=1e-4)

    print("KERNEL_OK")
</pallas_src>

<mosaic_0001>
module attributes {stable_mosaic.version = 11 : i64} {
  func.func @_fused_mpd_kernel(%arg0: i32, %arg1: memref<8x16xf32, #tpu.memory_space<vmem>>, %arg2: memref<16x24xf32, #tpu.memory_space<vmem>>, %arg3: memref<1x24xf32, #tpu.memory_space<vmem>>, %arg4: memref<24x24xf32, #tpu.memory_space<vmem>>, %arg5: memref<1x24xf32, #tpu.memory_space<vmem>>, %arg6: memref<24x24xf32, #tpu.memory_space<vmem>>, %arg7: memref<1x24xf32, #tpu.memory_space<vmem>>, %arg8: memref<24x8xf32, #tpu.memory_space<vmem>>, %arg9: memref<1x8xf32, #tpu.memory_space<vmem>>, %arg10: memref<8x128xf32, #tpu.memory_space<vmem>>) attributes {dimension_semantics = [#tpu.dimension_semantics<parallel>], iteration_bounds = array<i64: 2>, scalar_prefetch = 0 : i64, scratch_operands = 0 : i64, tpu.core_type = #tpu.core_type<tc>, window_params = [{transform_indices = @transform_0, window_bounds = array<i64: 8, 16>}, {pipeline_mode = #tpu.pipeline_mode<synchronous>, transform_indices = @transform_1, window_bounds = array<i64: 16, 24>}, {pipeline_mode = #tpu.pipeline_mode<synchronous>, transform_indices = @transform_2, window_bounds = array<i64: 1, 24>}, {pipeline_mode = #tpu.pipeline_mode<synchronous>, transform_indices = @transform_3, window_bounds = array<i64: 24, 24>}, {pipeline_mode = #tpu.pipeline_mode<synchronous>, transform_indices = @transform_4, window_bounds = array<i64: 1, 24>}, {pipeline_mode = #tpu.pipeline_mode<synchronous>, transform_indices = @transform_5, window_bounds = array<i64: 24, 24>}, {pipeline_mode = #tpu.pipeline_mode<synchronous>, transform_indices = @transform_6, window_bounds = array<i64: 1, 24>}, {pipeline_mode = #tpu.pipeline_mode<synchronous>, transform_indices = @transform_7, window_bounds = array<i64: 24, 8>}, {pipeline_mode = #tpu.pipeline_mode<synchronous>, transform_indices = @transform_8, window_bounds = array<i64: 1, 8>}, {transform_indices = @transform_9, window_bounds = array<i64: 8, 128>}]} {
    %c0 = arith.constant 0 : index
    %c0_0 = arith.constant 0 : index
    %0 = vector.load %arg1[%c0, %c0_0] : memref<8x16xf32, #tpu.memory_space<vmem>>, vector<8x16xf32>
    %cst = arith.constant 0.000000e+00 : f32
    %1 = vector.broadcast %cst : f32 to vector<8x128xf32>
    %c0_1 = arith.constant 0 : index
    %c0_2 = arith.constant 0 : index
    %2 = vector.load %arg2[%c0_1, %c0_2] : memref<16x24xf32, #tpu.memory_space<vmem>>, vector<16x24xf32>
    %c0_3 = arith.constant 0 : index
    %c0_4 = arith.constant 0 : index
    %3 = vector.load %arg3[%c0_3, %c0_4] : memref<1x24xf32, #tpu.memory_space<vmem>>, vector<1x24xf32>
    %cst_5 = arith.constant dense<0.000000e+00> : vector<8x24xf32>
    %4 = tpu.matmul %0, %2, %cst_5 {dimension_numbers = #tpu.dot_dimension_numbers<[1], [0], [0], [1], [0, 0, 1, 1], [], []>} : vector<8x16xf32>, vector<16x24xf32>, vector<8x24xf32> -> vector<8x24xf32>
    %5 = vector.broadcast %3 : vector<1x24xf32> to vector<8x24xf32>
    %6 = arith.addf %4, %5 : vector<8x24xf32>
    %cst_6 = arith.constant 0.000000e+00 : f32
    %7 = vector.broadcast %cst_6 : f32 to vector<8x24xf32>
    %8 = arith.cmpf oge, %6, %7 : vector<8x24xf32>
    %cst_7 = arith.constant 1.000000e-01 : f32
    %9 = vector.broadcast %cst_7 : f32 to vector<8x24xf32>
    %10 = arith.mulf %9, %6 : vector<8x24xf32>
    %11 = arith.select %8, %6, %10 : vector<8x24xi1>, vector<8x24xf32>
    %12 = tpu.iota {dimensions = array<i32: 1>} : vector<24x128xi32>
    %13 = tpu.iota {dimensions = array<i32: 0>} : vector<24x128xi32>
    %c0_i32 = arith.constant 0 : i32
    %14 = vector.broadcast %c0_i32 : i32 to vector<24x128xi32>
    %15 = arith.addi %13, %14 : vector<24x128xi32>
    %16 = arith.cmpi eq, %12, %15 : vector<24x128xi32>
    %cst_8 = arith.constant 1.000000e+00 : f32
    %cst_9 = arith.constant 0.000000e+00 : f32
    %17 = vector.broadcast %cst_8 : f32 to vector<24x128xf32>
    %18 = vector.broadcast %cst_9 : f32 to vector<24x128xf32>
    %19 = arith.select %16, %17, %18 : vector<24x128xi1>, vector<24x128xf32>
    %cst_10 = arith.constant dense<0.000000e+00> : vector<8x128xf32>
    %20 = tpu.matmul %11, %19, %cst_10 {dimension_numbers = #tpu.dot_dimension_numbers<[1], [0], [0], [1], [0, 0, 1, 1], [], []>} : vector<8x24xf32>, vector<24x128xf32>, vector<8x128xf32> -> vector<8x128xf32>
    %21 = arith.addf %1, %20 : vector<8x128xf32>
    %c0_11 = arith.constant 0 : index
    %c0_12 = arith.constant 0 : index
    %22 = vector.load %arg4[%c0_11, %c0_12] : memref<24x24xf32, #tpu.memory_space<vmem>>, vector<24x24xf32>
    %c0_13 = arith.constant 0 : index
    %c0_14 = arith.constant 0 : index
    %23 = vector.load %arg5[%c0_13, %c0_14] : memref<1x24xf32, #tpu.memory_space<vmem>>, vector<1x24xf32>
    %cst_15 = arith.constant dense<0.000000e+00> : vector<8x24xf32>
    %24 = tpu.matmul %11, %22, %cst_15 {dimension_numbers = #tpu.dot_dimension_numbers<[1], [0], [0], [1], [0, 0, 1, 1], [], []>} : vector<8x24xf32>, vector<24x24xf32>, vector<8x24xf32> -> vector<8x24xf32>
    %25 = vector.broadcast %23 : vector<1x24xf32> to vector<8x24xf32>
    %26 = arith.addf %24, %25 : vector<8x24xf32>
    %cst_16 = arith.constant 0.000000e+00 : f32
    %27 = vector.broadcast %cst_16 : f32 to vector<8x24xf32>
    %28 = arith.cmpf oge, %26, %27 : vector<8x24xf32>
    %cst_17 = arith.constant 1.000000e-01 : f32
    %29 = vector.broadcast %cst_17 : f32 to vector<8x24xf32>
    %30 = arith.mulf %29, %26 : vector<8x24xf32>
    %31 = arith.select %28, %26, %30 : vector<8x24xi1>, vector<8x24xf32>
    %32 = tpu.iota {dimensions = array<i32: 1>} : vector<24x128xi32>
    %33 = tpu.iota {dimensions = array<i32: 0>} : vector<24x128xi32>
    %c24_i32 = arith.constant 24 : i32
    %34 = vector.broadcast %c24_i32 : i32 to vector<24x128xi32>
    %35 = arith.addi %33, %34 : vector<24x128xi32>
    %36 = arith.cmpi eq, %32, %35 : vector<24x128xi32>
    %cst_18 = arith.constant 1.000000e+00 : f32
    %cst_19 = arith.constant 0.000000e+00 : f32
    %37 = vector.broadcast %cst_18 : f32 to vector<24x128xf32>
    %38 = vector.broadcast %cst_19 : f32 to vector<24x128xf32>
    %39 = arith.select %36, %37, %38 : vector<24x128xi1>, vector<24x128xf32>
    %cst_20 = arith.constant dense<0.000000e+00> : vector<8x128xf32>
    %40 = tpu.matmul %31, %39, %cst_20 {dimension_numbers = #tpu.dot_dimension_numbers<[1], [0], [0], [1], [0, 0, 1, 1], [], []>} : vector<8x24xf32>, vector<24x128xf32>, vector<8x128xf32> -> vector<8x128xf32>
    %41 = arith.addf %21, %40 : vector<8x128xf32>
    %c0_21 = arith.constant 0 : index
    %c0_22 = arith.constant 0 : index
    %42 = vector.load %arg6[%c0_21, %c0_22] : memref<24x24xf32, #tpu.memory_space<vmem>>, vector<24x24xf32>
    %c0_23 = arith.constant 0 : index
    %c0_24 = arith.constant 0 : index
    %43 = vector.load %arg7[%c0_23, %c0_24] : memref<1x24xf32, #tpu.memory_space<vmem>>, vector<1x24xf32>
    %cst_25 = arith.constant dense<0.000000e+00> : vector<8x24xf32>
    %44 = tpu.matmul %31, %42, %cst_25 {dimension_numbers = #tpu.dot_dimension_numbers<[1], [0], [0], [1], [0, 0, 1, 1], [], []>} : vector<8x24xf32>, vector<24x24xf32>, vector<8x24xf32> -> vector<8x24xf32>
    %45 = vector.broadcast %43 : vector<1x24xf32> to vector<8x24xf32>
    %46 = arith.addf %44, %45 : vector<8x24xf32>
    %cst_26 = arith.constant 0.000000e+00 : f32
    %47 = vector.broadcast %cst_26 : f32 to vector<8x24xf32>
    %48 = arith.cmpf oge, %46, %47 : vector<8x24xf32>
    %cst_27 = arith.constant 1.000000e-01 : f32
    %49 = vector.broadcast %cst_27 : f32 to vector<8x24xf32>
    %50 = arith.mulf %49, %46 : vector<8x24xf32>
    %51 = arith.select %48, %46, %50 : vector<8x24xi1>, vector<8x24xf32>
    %52 = tpu.iota {dimensions = array<i32: 1>} : vector<24x128xi32>
    %53 = tpu.iota {dimensions = array<i32: 0>} : vector<24x128xi32>
    %c48_i32 = arith.constant 48 : i32
    %54 = vector.broadcast %c48_i32 : i32 to vector<24x128xi32>
    %55 = arith.addi %53, %54 : vector<24x128xi32>
    %56 = arith.cmpi eq, %52, %55 : vector<24x128xi32>
    %cst_28 = arith.constant 1.000000e+00 : f32
    %cst_29 = arith.constant 0.000000e+00 : f32
    %57 = vector.broadcast %cst_28 : f32 to vector<24x128xf32>
    %58 = vector.broadcast %cst_29 : f32 to vector<24x128xf32>
    %59 = arith.select %56, %57, %58 : vector<24x128xi1>, vector<24x128xf32>
    %cst_30 = arith.constant dense<0.000000e+00> : vector<8x128xf32>
    %60 = tpu.matmul %51, %59, %cst_30 {dimension_numbers = #tpu.dot_dimension_numbers<[1], [0], [0], [1], [0, 0, 1, 1], [], []>} : vector<8x24xf32>, vector<24x128xf32>, vector<8x128xf32> -> vector<8x128xf32>
    %61 = arith.addf %41, %60 : vector<8x128xf32>
    %c0_31 = arith.constant 0 : index
    %c0_32 = arith.constant 0 : index
    %62 = vector.load %arg8[%c0_31, %c0_32] : memref<24x8xf32, #tpu.memory_space<vmem>>, vector<24x8xf32>
    %c0_33 = arith.constant 0 : index
    %c0_34 = arith.constant 0 : index
    %63 = vector.load %arg9[%c0_33, %c0_34] : memref<1x8xf32, #tpu.memory_space<vmem>>, vector<1x8xf32>
    %cst_35 = arith.constant dense<0.000000e+00> : vector<8x8xf32>
    %64 = tpu.matmul %51, %62, %cst_35 {dimension_numbers = #tpu.dot_dimension_numbers<[1], [0], [0], [1], [0, 0, 1, 1], [], []>} : vector<8x24xf32>, vector<24x8xf32>, vector<8x8xf32> -> vector<8x8xf32>
    %65 = vector.broadcast %63 : vector<1x8xf32> to vector<8x8xf32>
    %66 = arith.addf %64, %65 : vector<8x8xf32>
    %67 = tpu.iota {dimensions = array<i32: 1>} : vector<8x128xi32>
    %68 = tpu.iota {dimensions = array<i32: 0>} : vector<8x128xi32>
    %c72_i32 = arith.constant 72 : i32
    %69 = vector.broadcast %c72_i32 : i32 to vector<8x128xi32>
    %70 = arith.addi %68, %69 : vector<8x128xi32>
    %71 = arith.cmpi eq, %67, %70 : vector<8x128xi32>
    %cst_36 = arith.constant 1.000000e+00 : f32
    %cst_37 = arith.constant 0.000000e+00 : f32
    %72 = vector.broadcast %cst_36 : f32 to vector<8x128xf32>
    %73 = vector.broadcast %cst_37 : f32 to vector<8x128xf32>
    %74 = arith.select %71, %72, %73 : vector<8x128xi1>, vector<8x128xf32>
    %cst_38 = arith.constant dense<0.000000e+00> : vector<8x128xf32>
    %75 = tpu.matmul %66, %74, %cst_38 {dimension_numbers = #tpu.dot_dimension_numbers<[1], [0], [0], [1], [0, 0, 1, 1], [], []>} : vector<8x8xf32>, vector<8x128xf32>, vector<8x128xf32> -> vector<8x128xf32>
    %76 = arith.addf %61, %75 : vector<8x128xf32>
    %c0_39 = arith.constant 0 : index
    %c0_40 = arith.constant 0 : index
    %77 = vector.load %arg10[%c0_39, %c0_40] : memref<8x128xf32, #tpu.memory_space<vmem>>, vector<8x128xf32>
    tpu.vector_store %arg10[%c0_39, %c0_40], %76 {strides = array<i32>} : memref<8x128xf32, #tpu.memory_space<vmem>>, vector<8x128xf32>,
    return
  }
  func.func @transform_0(%arg0: i32) -> (i32, i32) {
    %c0_i32 = arith.constant 0 : i32
    %c0_i32_0 = arith.constant 0 : i32
    return %arg0, %c0_i32 : i32, i32
  }
  func.func @transform_1(%arg0: i32) -> (i32, i32) {
    %c0_i32 = arith.constant 0 : i32
    %c0_i32_0 = arith.constant 0 : i32
    %c0_i32_1 = arith.constant 0 : i32
    return %c0_i32, %c0_i32_0 : i32, i32
  }
  func.func @transform_2(%arg0: i32) -> (i32, i32) {
    %c0_i32 = arith.constant 0 : i32
    %c0_i32_0 = arith.constant 0 : i32
    %c0_i32_1 = arith.constant 0 : i32
    return %c0_i32, %c0_i32_0 : i32, i32
  }
  func.func @transform_3(%arg0: i32) -> (i32, i32) {
    %c0_i32 = arith.constant 0 : i32
    %c0_i32_0 = arith.constant 0 : i32
    %c0_i32_1 = arith.constant 0 : i32
    return %c0_i32, %c0_i32_0 : i32, i32
  }
  func.func @transform_4(%arg0: i32) -> (i32, i32) {
    %c0_i32 = arith.constant 0 : i32
    %c0_i32_0 = arith.constant 0 : i32
    %c0_i32_1 = arith.constant 0 : i32
    return %c0_i32, %c0_i32_0 : i32, i32
  }
  func.func @transform_5(%arg0: i32) -> (i32, i32) {
    %c0_i32 = arith.constant 0 : i32
    %c0_i32_0 = arith.constant 0 : i32
    %c0_i32_1 = arith.constant 0 : i32
    return %c0_i32, %c0_i32_0 : i32, i32
  }
  func.func @transform_6(%arg0: i32) -> (i32, i32) {
    %c0_i32 = arith.constant 0 : i32
    %c0_i32_0 = arith.constant 0 : i32
    %c0_i32_1 = arith.constant 0 : i32
    return %c0_i32, %c0_i32_0 : i32, i32
  }
  func.func @transform_7(%arg0: i32) -> (i32, i32) {
    %c0_i32 = arith.constant 0 : i32
    %c0_i32_0 = arith.constant 0 : i32
    %c0_i32_1 = arith.constant 0 : i32
    return %c0_i32, %c0_i32_0 : i32, i32
  }
  func.func @transform_8(%arg0: i32) -> (i32, i32) {
    %c0_i32 = arith.constant 0 : i32
    %c0_i32_0 = arith.constant 0 : i32
    %c0_i32_1 = arith.constant 0 : i32
    return %c0_i32, %c0_i32_0 : i32, i32
  }
  func.func @transform_9(%arg0: i32) -> (i32, i32) {
    %c0_i32 = arith.constant 0 : i32
    %c0_i32_0 = arith.constant 0 : i32
    return %arg0, %c0_i32 : i32, i32
  }
}

</mosaic_0001>

<llo_original>
// kernel: tpu_custom_call.1
$region0: #{tpu_custom_call.1}
  #allocation0 [shape = 'u32[]', space=smem, size = 0x4, offset = 0x4, fixed_abs, tag = 'smem constant byte address 0x4 - core index']
  #allocation1 [shape = 'u32[144,128]{1,0:T(1,128)}', space=vmem, size = 0x12000, scoped, tag = 'internal scratch']
  %s0 = inlined_call_operand.hbm [shape: f32[16,16], index: 0, kind: input, shape index: {}]
  %s1 = inlined_call_operand.hbm [shape: f32[16,24], index: 1, kind: input, shape index: {}]
  %s2 = inlined_call_operand.vmem [shape: f32[1,24], index: 2, kind: input, shape index: {}]
  %s3 = inlined_call_operand.vmem [shape: f32[24,24], index: 3, kind: input, shape index: {}]
  %s4 = inlined_call_operand.vmem [shape: f32[1,24], index: 4, kind: input, shape index: {}]
  %s5 = inlined_call_operand.hbm [shape: f32[24,24], index: 5, kind: input, shape index: {}]
  %s6 = inlined_call_operand.vmem [shape: f32[1,24], index: 6, kind: input, shape index: {}]
  %s7 = inlined_call_operand.vmem [shape: f32[24,8], index: 7, kind: input, shape index: {}]
  %s8 = inlined_call_operand.vmem [shape: f32[1,8], index: 8, kind: input, shape index: {}]
  %s9 = inlined_call_operand.hbm [shape: f32[16,128], index: 9, kind: output, shape index: {}]
  %s10 = sld [smem:[#allocation0]]
  $region81: #{tpu_custom_call.1} parent=0
    _
  %s12 = ssub.s32 1, %s10
  %s13 = scalar_select 0, %s12, %s10
  $region1: #{tpu_custom_call.1} parent=0
    #allocation2 [shape = 'u8[8192]{0}', space=vmem, size = 0x2000, scoped, tag = 'input window, operand 0']
    #allocation3 [shape = 's32[2]{0}', space=sflag, size = 0x8, scoped, tag = 'scoped memory for tpu_custom_call.1']
    #allocation4 [shape = 's32[2]{0}', space=sflag, size = 0x8, scoped, tag = 'scoped memory for tpu_custom_call.1']
    #allocation5 [shape = 'u8[8192]{0}', space=vmem, size = 0x2000, scoped, tag = 'input window, operand 1, single buffered']
    #allocation6 [shape = 's32[1]{0}', space=sflag, size = 0x4, scoped, tag = 'scoped memory for tpu_custom_call.1']
    #allocation7 [shape = 'u8[12288]{0}', space=vmem, size = 0x3000, scoped, tag = 'input window, operand 5, single buffered']
    #allocation8 [shape = 'u8[8192]{0}', space=vmem, size = 0x2000, scoped, tag = 'output window, operand 0']
    %14 = vsyncpa [#allocation3], 0
    %s15 = scalar_lea.sflag [#allocation3], 1
    %16 = vsyncpa %s15, 0
    %17 = vsyncpa [#allocation6], 0
    %18 = vsyncpa [#allocation4], 0
    %s19 = scalar_lea.sflag [#allocation4], 1
    %20 = vsyncpa %s19, 0
    loop: start=0, step=1, limit=4
    $region2: #{tpu_custom_call.1} parent=1 // loop_pre_header
      _
    $region3: #{tpu_custom_call.1} parent=1 // loop_header
      %s22 = sphi 0, %s26
      %p23 = scmp.ge.s32.totalorder %s22, 4
      %s32 = sphi 0, %s34
      %s35 = sphi 0, %s32
      %s36 = sphi 0, %s35
      %s52 = sphi 0, %s36
      %s56 = sphi 0, %s56
      %s58 = sphi 0, %s56
      %s59 = sphi 0, %s58
      %s73 = sphi 0, %s59
      %s77 = sphi 0, %s77
      %s79 = sphi 0, %s77
      %s80 = sphi 0, %s79
      %s94 = sphi 0, %s80
      %s98 = sphi 0, %s98
      %s100 = sphi 0, %s98
      %s101 = sphi 0, %s100
      %s115 = sphi 0, %s101
      %s119 = sphi 0, %s119
      %s121 = sphi 0, %s119
      %s122 = sphi 0, %s121
      %s136 = sphi 0, %s122
      %s140 = sphi 0, %s140
      %s142 = sphi 0, %s140
      %s143 = sphi 0, %s142
      %s157 = sphi 0, %s143
      %s161 = sphi 0, %s161
      %s163 = sphi 0, %s161
      %s164 = sphi 0, %s163
      %s178 = sphi 0, %s164
      %s182 = sphi 0, %s182
      %s184 = sphi 0, %s182
      %s185 = sphi 0, %s184
      %s199 = sphi 0, %s185
      %s203 = sphi 0, %s203
      %s205 = sphi 0, %s203
      %s206 = sphi 0, %s205
      %s220 = sphi 0, %s206
      %s226 = sphi 0, %s228
      %s229 = sphi 0, %s226
      %s230 = sphi 0, %s229
      %s246 = sphi 0, %s230
    $region4: #{tpu_custom_call.1} parent=1 // loop_header_branch
      %25 = sbr.rel (%p23) target = $region8
    $region5: #{tpu_custom_call.1} parent=1 // loop_body
      %s27 = ssub.s32 %s22, 1
      %s28 = ssub.s32 %s22, 2
      %s29 = sadd.s32 %s22, 1
      %s30 = ssub.s32 %s22, %s29
      %p31 = scmp.eq.s32.totalorder %s30, 0
      %s33 = sadd.s32 %s32, 1
      %s34 = scalar_select %p31, %s32, %s33
      %p37 = pneg %p31
      %p38 = scmp.eq.s32.totalorder %s22, 1
      %p39 = por %p37, %p38
      %p40 = scmp.ne.s32.totalorder %s32, %s35
      %p41 = scmp.eq.s32.totalorder %s22, 0
      %p42 = por %p40, %p41
      %p43 = scmp.ne.s32.totalorder %s32, %s35
      %p44 = scmp.eq.s32.totalorder %s27, 1
      %p45 = por %p43, %p44
      %p46 = scmp.ne.s32.totalorder %s35, %s36
      %p47 = scmp.eq.s32.totalorder %s27, 0
      %p48 = por %p46, %p47
      %p49 = scmp.ne.s32.totalorder %s35, %s36
      %p50 = scmp.eq.s32.totalorder %s28, 1
      %p51 = por %p49, %p50
      %p53 = scmp.ne.s32.totalorder %s36, %s52
      %p54 = scmp.eq.s32.totalorder %s28, 0
      %p55 = por %p53, %p54
      %s57 = sadd.s32 %s56, 1
      %p60 = scmp.eq.s32.totalorder %s22, 1
      %p61 = scmp.ne.s32.totalorder %s56, %s58
      %p62 = scmp.eq.s32.totalorder %s22, 0
      %p63 = por %p61, %p62
      %p64 = scmp.ne.s32.totalorder %s56, %s58
      %p65 = scmp.eq.s32.totalorder %s27, 1
      %p66 = por %p64, %p65
      %p67 = scmp.ne.s32.totalorder %s58, %s59
      %p68 = scmp.eq.s32.totalorder %s27, 0
      %p69 = por %p67, %p68
      %p70 = scmp.ne.s32.totalorder %s58, %s59
      %p71 = scmp.eq.s32.totalorder %s28, 1
      %p72 = por %p70, %p71
      %p74 = scmp.ne.s32.totalorder %s59, %s73
      %p75 = scmp.eq.s32.totalorder %s28, 0
      %p76 = por %p74, %p75
      %s78 = sadd.s32 %s77, 1
      %p81 = scmp.eq.s32.totalorder %s22, 1
      %p82 = scmp.ne.s32.totalorder %s77, %s79
      %p83 = scmp.eq.s32.totalorder %s22, 0
      %p84 = por %p82, %p83
      %p85 = scmp.ne.s32.totalorder %s77, %s79
      %p86 = scmp.eq.s32.totalorder %s27, 1
      %p87 = por %p85, %p86
      %p88 = scmp.ne.s32.totalorder %s79, %s80
      %p89 = scmp.eq.s32.totalorder %s27, 0
      %p90 = por %p88, %p89
      %p91 = scmp.ne.s32.totalorder %s79, %s80
      %p92 = scmp.eq.s32.totalorder %s28, 1
      %p93 = por %p91, %p92
      %p95 = scmp.ne.s32.totalorder %s80, %s94
      %p96 = scmp.eq.s32.totalorder %s28, 0
      %p97 = por %p95, %p96
      %s99 = sadd.s32 %s98, 1
      %p102 = scmp.eq.s32.totalorder %s22, 1
      %p103 = scmp.ne.s32.totalorder %s98, %s100
      %p104 = scmp.eq.s32.totalorder %s22, 0
      %p105 = por %p103, %p104
      %p106 = scmp.ne.s32.totalorder %s98, %s100
      %p107 = scmp.eq.s32.totalorder %s27, 1
      %p108 = por %p106, %p107
      %p109 = scmp.ne.s32.totalorder %s100, %s101
      %p110 = scmp.eq.s32.totalorder %s27, 0
      %p111 = por %p109, %p110
      %p112 = scmp.ne.s32.totalorder %s100, %s101
      %p113 = scmp.eq.s32.totalorder %s28, 1
      %p114 = por %p112, %p113
      %p116 = scmp.ne.s32.totalorder %s101, %s115
      %p117 = scmp.eq.s32.totalorder %s28, 0
      %p118 = por %p116, %p117
      %s120 = sadd.s32 %s119, 1
      %p123 = scmp.eq.s32.totalorder %s22, 1
      %p124 = scmp.ne.s32.totalorder %s119, %s121
      %p125 = scmp.eq.s32.totalorder %s22, 0
      %p126 = por %p124, %p125
      %p127 = scmp.ne.s32.totalorder %s119, %s121
      %p128 = scmp.eq.s32.totalorder %s27, 1
      %p129 = por %p127, %p128
      %p130 = scmp.ne.s32.totalorder %s121, %s122
      %p131 = scmp.eq.s32.totalorder %s27, 0
      %p132 = por %p130, %p131
      %p133 = scmp.ne.s32.totalorder %s121, %s122
      %p134 = scmp.eq.s32.totalorder %s28, 1
      %p135 = por %p133, %p134
      %p137 = scmp.ne.s32.totalorder %s122, %s136
      %p138 = scmp.eq.s32.totalorder %s28, 0
      %p139 = por %p137, %p138
      %s141 = sadd.s32 %s140, 1
      %p144 = scmp.eq.s32.totalorder %s22, 1
      %p145 = scmp.ne.s32.totalorder %s140, %s142
      %p146 = scmp.eq.s32.totalorder %s22, 0
      %p147 = por %p145, %p146
      %p148 = scmp.ne.s32.totalorder %s140, %s142
      %p149 = scmp.eq.s32.totalorder %s27, 1
      %p150 = por %p148, %p149
      %p151 = scmp.ne.s32.totalorder %s142, %s143
      %p152 = scmp.eq.s32.totalorder %s27, 0
      %p153 = por %p151, %p152
      %p154 = scmp.ne.s32.totalorder %s142, %s143
      %p155 = scmp.eq.s32.totalorder %s28, 1
      %p156 = por %p154, %p155
      %p158 = scmp.ne.s32.totalorder %s143, %s157
      %p159 = scmp.eq.s32.totalorder %s28, 0
      %p160 = por %p158, %p159
      %s162 = sadd.s32 %s161, 1
      %p165 = scmp.eq.s32.totalorder %s22, 1
      %p166 = scmp.ne.s32.totalorder %s161, %s163
      %p167 = scmp.eq.s32.totalorder %s22, 0
      %p168 = por %p166, %p167
      %p169 = scmp.ne.s32.totalorder %s161, %s163
      %p170 = scmp.eq.s32.totalorder %s27, 1
      %p171 = por %p169, %p170
      %p172 = scmp.ne.s32.totalorder %s163, %s164
      %p173 = scmp.eq.s32.totalorder %s27, 0
      %p174 = por %p172, %p173
      %p175 = scmp.ne.s32.totalorder %s163, %s164
      %p176 = scmp.eq.s32.totalorder %s28, 1
      %p177 = por %p175, %p176
      %p179 = scmp.ne.s32.totalorder %s164, %s178
      %p180 = scmp.eq.s32.totalorder %s28, 0
      %p181 = por %p179, %p180
      %s183 = sadd.s32 %s182, 1
      %p186 = scmp.eq.s32.totalorder %s22, 1
      %p187 = scmp.ne.s32.totalorder %s182, %s184
      %p188 = scmp.eq.s32.totalorder %s22, 0
      %p189 = por %p187, %p188
      %p190 = scmp.ne.s32.totalorder %s182, %s184
      %p191 = scmp.eq.s32.totalorder %s27, 1
      %p192 = por %p190, %p191
      %p193 = scmp.ne.s32.totalorder %s184, %s185
      %p194 = scmp.eq.s32.totalorder %s27, 0
      %p195 = por %p193, %p194
      %p196 = scmp.ne.s32.totalorder %s184, %s185
      %p197 = scmp.eq.s32.totalorder %s28, 1
      %p198 = por %p196, %p197
      %p200 = scmp.ne.s32.totalorder %s185, %s199
      %p201 = scmp.eq.s32.totalorder %s28, 0
      %p202 = por %p200, %p201
      %s204 = sadd.s32 %s203, 1
      %p207 = scmp.eq.s32.totalorder %s22, 1
      %p208 = scmp.ne.s32.totalorder %s203, %s205
      %p209 = scmp.eq.s32.totalorder %s22, 0
      %p210 = por %p208, %p209
      %p211 = scmp.ne.s32.totalorder %s203, %s205
      %p212 = scmp.eq.s32.totalorder %s27, 1
      %p213 = por %p211, %p212
      %p214 = scmp.ne.s32.totalorder %s205, %s206
      %p215 = scmp.eq.s32.totalorder %s27, 0
      %p216 = por %p214, %p215
      %p217 = scmp.ne.s32.totalorder %s205, %s206
      %p218 = scmp.eq.s32.totalorder %s28, 1
      %p219 = por %p217, %p218
      %p221 = scmp.ne.s32.totalorder %s206, %s220
      %p222 = scmp.eq.s32.totalorder %s28, 0
      %p223 = por %p221, %p222
      %s224 = ssub.s32 %s22, %s29
      %p225 = scmp.eq.s32.totalorder %s224, 0
      %s227 = sadd.s32 %s226, 1
      %s228 = scalar_select %p225, %s226, %s227
      %p231 = pneg %p225
      %p232 = scmp.eq.s32.totalorder %s22, 1
      %p233 = por %p231, %p232
      %p234 = scmp.ne.s32.totalorder %s226, %s229
      %p235 = scmp.eq.s32.totalorder %s22, 0
      %p236 = por %p234, %p235
      %p237 = scmp.ne.s32.totalorder %s226, %s229
      %p238 = scmp.eq.s32.totalorder %s27, 1
      %p239 = por %p237, %p238
      %p240 = scmp.ne.s32.totalorder %s229, %s230
      %p241 = scmp.eq.s32.totalorder %s27, 0
      %p242 = por %p240, %p241
      %p243 = scmp.ne.s32.totalorder %s229, %s230
      %p244 = scmp.eq.s32.totalorder %s28, 1
      %p245 = por %p243, %p244
      %p247 = scmp.ne.s32.totalorder %s230, %s246
      %p248 = scmp.eq.s32.totalorder %s28, 0
      %p249 = por %p247, %p248
      %p250 = scmp.le.s32.totalorder 1, %s22
      %p251 = scmp.lt.s32.totalorder %s22, 3
      %p252 = pnand %p250, %p251
      %p253 = pneg %p252
      // Predicated region
      $region9: #{tpu_custom_call.1} parent=5 // pred_check
        _
      $region10: #{tpu_custom_call.1} parent=5 // pred_check_branch
        %255 = sbr.rel (%p252) target = $region12
      $region11: #{tpu_custom_call.1} parent=5 // pred_region
        %s256 = ssub.s32 %s22, 1
        // Predicated region
        $region13: #{tpu_custom_call.1} parent=11 // pred_check
          %p257 = pneg %p69
        $region14: #{tpu_custom_call.1} parent=11 // pred_check_branch
          %259 = sbr.rel (%p257) target = $region16
        $region15: #{tpu_custom_call.1} parent=11 // pred_region
          %s261 = ssub.s32 256, 256
          %262 = vsyncadd [#allocation6], %s261
          %s263 = sshll.u32 [#allocation5], 4
          %s264 = int_to_ptr.vmem [resolvable:$true] %s263
          %269 = dma.hbm_to_vmem [thread:$0]  %s1, 256, %s264, [#allocation6], 128, 128, 8
        $region16: #{tpu_custom_call.1} parent=11 // pred_fallthru
          _
        // Predicated region
        $region17: #{tpu_custom_call.1} parent=11 // pred_check
          %p270 = pneg %p90
        $region18: #{tpu_custom_call.1} parent=11 // pred_check_branch
          %272 = sbr.rel (%p270) target = $region20
        $region19: #{tpu_custom_call.1} parent=11 // pred_region
          _
        $region20: #{tpu_custom_call.1} parent=11 // pred_fallthru
          _
        // Predicated region
        $region21: #{tpu_custom_call.1} parent=11 // pred_check
          %p273 = pneg %p111
        $region22: #{tpu_custom_call.1} parent=11 // pred_check_branch
          %275 = sbr.rel (%p273) target = $region24
        $region23: #{tpu_custom_call.1} parent=11 // pred_region
          _
        $region24: #{tpu_custom_call.1} parent=11 // pred_fallthru
          _
        // Predicated region
        $region25: #{tpu_custom_call.1} parent=11 // pred_check
          %p276 = pneg %p132
        $region26: #{tpu_custom_call.1} parent=11 // pred_check_branch
          %278 = sbr.rel (%p276) target = $region28
        $region27: #{tpu_custom_call.1} parent=11 // pred_region
          _
        $region28: #{tpu_custom_call.1} parent=11 // pred_fallthru
          _
        // Predicated region
        $region29: #{tpu_custom_call.1} parent=11 // pred_check
          %p279 = pneg %p153
        $region30: #{tpu_custom_call.1} parent=11 // pred_check_branch
          %281 = sbr.rel (%p279) target = $region32
        $region31: #{tpu_custom_call.1} parent=11 // pred_region
          %s283 = ssub.s32 384, 384
          %284 = vsyncadd [#allocation6], %s283
          %s285 = sshll.u32 [#allocation7], 4
          %s286 = int_to_ptr.vmem [resolvable:$true] %s285
          %291 = dma.hbm_to_vmem [thread:$0]  %s5, 384, %s286, [#allocation6], 128, 128, 8
        $region32: #{tpu_custom_call.1} parent=11 // pred_fallthru
          _
        // Predicated region
        $region33: #{tpu_custom_call.1} parent=11 // pred_check
          %p292 = pneg %p174
        $region34: #{tpu_custom_call.1} parent=11 // pred_check_branch
          %294 = sbr.rel (%p292) target = $region36
        $region35: #{tpu_custom_call.1} parent=11 // pred_region
          _
        $region36: #{tpu_custom_call.1} parent=11 // pred_fallthru
          _
        // Predicated region
        $region37: #{tpu_custom_call.1} parent=11 // pred_check
          %p295 = pneg %p195
        $region38: #{tpu_custom_call.1} parent=11 // pred_check_branch
          %297 = sbr.rel (%p295) target = $region40
        $region39: #{tpu_custom_call.1} parent=11 // pred_region
          _
        $region40: #{tpu_custom_call.1} parent=11 // pred_fallthru
          _
        // Predicated region
        $region41: #{tpu_custom_call.1} parent=11 // pred_check
          %p298 = pneg %p216
        $region42: #{tpu_custom_call.1} parent=11 // pred_check_branch
          %300 = sbr.rel (%p298) target = $region44
        $region43: #{tpu_custom_call.1} parent=11 // pred_region
          _
        $region44: #{tpu_custom_call.1} parent=11 // pred_fallthru
          _
      $region12: #{tpu_custom_call.1} parent=5 // pred_fallthru
        _
      %p301 = scmp.lt.s32.totalorder %s22, 2
      // Predicated region
      $region45: #{tpu_custom_call.1} parent=5 // pred_check
        %p302 = pneg %p301
      $region46: #{tpu_custom_call.1} parent=5 // pred_check_branch
        %304 = sbr.rel (%p302) target = $region48
      $region47: #{tpu_custom_call.1} parent=5 // pred_region
        // Predicated region
        $region49: #{tpu_custom_call.1} parent=47 // pred_check
          %p305 = pneg %p42
        $region50: #{tpu_custom_call.1} parent=47 // pred_check_branch
          %307 = sbr.rel (%p305) target = $region52
        $region51: #{tpu_custom_call.1} parent=47 // pred_region
          %s308 = sand.u32 %s32, 1
          %s309 = scalar_lea.sflag [#allocation3], %s308
          %s310 = sand.u32 %s32, 1
          %s311 = smul.addr %s310, 8
          %s312 = scalar_lea.vmem [#allocation2], %s311
          %s314 = ssub.s32 128, 128
          %315 = vsyncadd %s309, %s314
          %s316 = smul.addr %s22, 128
          %s317 = scalar_lea.hbm %s0, %s316
          %s319 = sshll.u32 %s312, 4
          %s320 = int_to_ptr.vmem [resolvable:$true] %s319
          %322 = dma.hbm_to_vmem [thread:$0]  %s317, 128, %s320, %s309
        $region52: #{tpu_custom_call.1} parent=47 // pred_fallthru
          _
      $region48: #{tpu_custom_call.1} parent=5 // pred_fallthru
        _
      %p323 = scmp.le.s32.totalorder 1, %s22
      %p324 = scmp.lt.s32.totalorder %s22, 3
      %p325 = pnand %p323, %p324
      %p326 = pneg %p325
      // Predicated region
      $region53: #{tpu_custom_call.1} parent=5 // pred_check
        _
      $region54: #{tpu_custom_call.1} parent=5 // pred_check_branch
        %328 = sbr.rel (%p325) target = $region56
      $region55: #{tpu_custom_call.1} parent=5 // pred_region
        %s329 = ssub.s32 %s22, 1
        %s330 = sand.u32 %s35, 1
        %s331 = scalar_lea.sflag [#allocation3], %s330
        %s332 = sand.u32 %s35, 1
        %s333 = smul.addr %s332, 8
        %s334 = scalar_lea.vmem [#allocation2], %s333
        // Predicated region
        $region57: #{tpu_custom_call.1} parent=55 // pred_check
          %p335 = pneg %p48
        $region58: #{tpu_custom_call.1} parent=55 // pred_check_branch
          %337 = sbr.rel (%p335) target = $region60
        $region59: #{tpu_custom_call.1} parent=55 // pred_region
          %338 = dma.done %s331, 128
        $region60: #{tpu_custom_call.1} parent=55 // pred_fallthru
          _
        // Predicated region
        $region61: #{tpu_custom_call.1} parent=55 // pred_check
          %p339 = pneg %p69
        $region62: #{tpu_custom_call.1} parent=55 // pred_check_branch
          %341 = sbr.rel (%p339) target = $region64
        $region63: #{tpu_custom_call.1} parent=55 // pred_region
          %342 = dma.done [#allocation6], 256
        $region64: #{tpu_custom_call.1} parent=55 // pred_fallthru
          _
        // Predicated region
        $region65: #{tpu_custom_call.1} parent=55 // pred_check
          %p343 = pneg %p153
        $region66: #{tpu_custom_call.1} parent=55 // pred_check_branch
          %345 = sbr.rel (%p343) target = $region68
        $region67: #{tpu_custom_call.1} parent=55 // pred_region
          %346 = dma.done [#allocation6], 384
        $region68: #{tpu_custom_call.1} parent=55 // pred_fallthru
          _
        %s347 = sand.u32 %s35, 1
        %s348 = scalar_lea.sflag [#allocation3], %s347
        %s349 = sand.u32 %s35, 1
        %s350 = smul.addr %s349, 8
        %s351 = scalar_lea.vmem [#allocation2], %s350
        %p352 = pneg %p48
        %p353 = pneg %p45
        %p354 = pneg %p69
        %p355 = pneg %p66
        %p356 = pneg %p90
        %p357 = pneg %p87
        %p358 = pneg %p111
        %p359 = pneg %p108
        %p360 = pneg %p132
        %p361 = pneg %p129
        %p362 = pneg %p153
        %p363 = pneg %p150
        %p364 = pneg %p174
        %p365 = pneg %p171
        %p366 = pneg %p195
        %p367 = pneg %p192
        %p368 = pneg %p216
        %p369 = pneg %p213
        %p370 = pneg %p242
        %p371 = pneg %p239
        %s372 = sand.u32 %s229, 1
        %s373 = scalar_lea.sflag [#allocation4], %s372
        %s374 = sand.u32 %s229, 1
        %s375 = smul.addr %s374, 8
        %s376 = scalar_lea.vmem [#allocation8], %s375
        %v377 = vld [vmem:[%s334] sm:$0xff]
        %v378 = vld [vmem:[#allocation5] sm:$0xff]
        %v379 = vld [vmem:[#allocation5 + $0x8] sm:$0xff]
        %v380 = vld [vmem:[%s2] sm:$0x1]
        %v382 = vlaneseq
        %v383 = vshrl.u32 %v382, 7
        %v384 = vsub.s32 0, %v383
        %v385 = vrot.slane %v380, %v384
        %vm387 = vcmask 130048
        %v389 = vsel %vm387, %v377, 0
        %391 = vmatprep.subr.mxu0 0.0
        %392 = vmatpush1.msra.mxu0 0.0
        %393 = vmatprep.subr.mxu0 0.0
        %394 = vmatpush1.msra.mxu0 0.0
        %395 = vmatprep.subr.mxu0 0.0
        %396 = vmatpush1.msra.mxu0 0.0
        %397 = vmatprep.subr.mxu0 0.0
        %398 = vmatpush1.msra.mxu0 0.0
        %399 = vmatprep.subr.mxu0 0.0
        %400 = vmatpush1.msra.mxu0 0.0
        %401 = vmatprep.subr.mxu0 0.0
        %402 = vmatpush1.msra.mxu0 0.0
        %403 = vmatprep.subr.mxu0 0.0
        %404 = vmatpush1.msra.mxu0 0.0
        %405 = vmatprep.subr.mxu0 0.0
        %406 = vmatpush1.msra.mxu0 0.0
        %407 = vmatprep.subr.mxu0 0.0
        %408 = vmatpush1.msra.mxu0 0.0
        %409 = vmatprep.subr.mxu0 0.0
        %410 = vmatpush1.msra.mxu0 0.0
        %411 = vmatprep.subr.mxu0 0.0
        %412 = vmatpush1.msra.mxu0 0.0
        %413 = vmatprep.subr.mxu0 0.0
        %414 = vmatpush1.msra.mxu0 0.0
        %415 = vmatprep.subr.mxu0 0.0
        %416 = vmatpush1.msra.mxu0 0.0
        %417 = vmatprep.subr.mxu0 0.0
        %418 = vmatpush1.msra.mxu0 0.0
        %419 = vmatprep.subr.mxu0 0.0
        %420 = vmatpush1.msra.mxu0 %v379
        %421 = vmatprep.subr.mxu0 0.0
        %422 = vmatpush1.msra.mxu0 %v378
        %423 = vmatprep.subr.mxu0 0.0
        %424 = vmatpush2.msra.mxu0 0.0
        %425 = vmatprep.subr.mxu0 0.0
        %426 = vmatpush2.msra.mxu0 0.0
        %427 = vmatprep.subr.mxu0 0.0
        %428 = vmatpush2.msra.mxu0 0.0
        %429 = vmatprep.subr.mxu0 0.0
        %430 = vmatpush2.msra.mxu0 0.0
        %431 = vmatprep.subr.mxu0 0.0
        %432 = vmatpush2.msra.mxu0 0.0
        %433 = vmatprep.subr.mxu0 0.0
        %434 = vmatpush2.msra.mxu0 0.0
        %435 = vmatprep.subr.mxu0 0.0
        %436 = vmatpush2.msra.mxu0 0.0
        %437 = vmatprep.subr.mxu0 0.0
        %438 = vmatpush2.msra.mxu0 0.0
        %439 = vmatprep.subr.mxu0 0.0
        %440 = vmatpush2.msra.mxu0 0.0
        %441 = vmatprep.subr.mxu0 0.0
        %442 = vmatpush2.msra.mxu0 0.0
        %443 = vmatprep.subr.mxu0 0.0
        %444 = vmatpush2.msra.mxu0 0.0
        %445 = vmatprep.subr.mxu0 0.0
        %446 = vmatpush2.msra.mxu0 0.0
        %447 = vmatprep.subr.mxu0 0.0
        %448 = vmatpush2.msra.mxu0 0.0
        %449 = vmatprep.subr.mxu0 0.0
        %450 = vmatpush2.msra.mxu0 0.0
        %451 = vmatprep.subr.mxu0 0.0
        %452 = vmatpush2.msra.mxu0 0.0
        %453 = vmatprep.subr.mxu0 0.0
        %454 = vmatpush2.msra.mxu0 0.0
        %455 = vmatprep.mubr.f32.mxu0 0.0
        %456 = vmatmul.mubr.f32.gmra.mxu0 %v389
        %v457 = vpop.f32.mrf.mxu0
        %v458 = vadd.f32 %v385, %v457
        %v459 = vpop.f32.mrf.mxu0
        %460 = vdwg.mxu0
        %vm461 = vcmp.ge.f32.partialorder %v458, 0.0
        %v462 = vmul.f32 %v458, 0.1
        %v463 = vsel %vm461, %v458, %v462
        %v464 = vlaneseq
        %v465 = vand.u32 %v464, 127
        %v466 = vlaneseq
        %v467 = vshrl.u32 %v466, 7
        %v468 = vadd.s32 %v467, 8
        %v469 = vadd.s32 %v467, 16
        %vm470 = vcmp.eq.s32.totalorder %v465, %v467
        %vm471 = vcmp.eq.s32.totalorder %v465, %v468
        %vm472 = vcmp.eq.s32.totalorder %v465, %v469
        %v473 = vsel %vm470, 1.0, 0.0
        %v474 = vsel %vm471, 1.0, 0.0
        %v475 = vsel %vm472, 1.0, 0.0
        %v476 = vld [vmem:[%s3] sm:$0xff]
        %v477 = vld [vmem:[%s3 + $0x8] sm:$0xff]
        %v478 = vld [vmem:[%s3 + $0x10] sm:$0xff]
        %v479 = vld [vmem:[%s4] sm:$0x1]
        %v481 = vlaneseq
        %v482 = vshrl.u32 %v481, 7
        %v483 = vsub.s32 0, %v482
        %v484 = vrot.slane %v479, %v483
        %vm486 = vcmask 195584
        %v488 = vsel %vm486, %v463, 0
        %490 = vmatprep.subr.mxu0 0.0
        %491 = vmatpush1.msra.mxu0 0.0
        %492 = vmatprep.subr.mxu0 0.0
        %493 = vmatpush1.msra.mxu0 0.0
        %494 = vmatprep.subr.mxu0 0.0
        %495 = vmatpush1.msra.mxu0 0.0
        %496 = vmatprep.subr.mxu0 0.0
        %497 = vmatpush1.msra.mxu0 0.0
        %498 = vmatprep.subr.mxu0 0.0
        %499 = vmatpush1.msra.mxu0 0.0
        %500 = vmatprep.subr.mxu0 0.0
        %501 = vmatpush1.msra.mxu0 0.0
        %502 = vmatprep.subr.mxu0 0.0
        %503 = vmatpush1.msra.mxu0 0.0
        %504 = vmatprep.subr.mxu0 0.0
        %505 = vmatpush1.msra.mxu0 0.0
        %506 = vmatprep.subr.mxu0 0.0
        %507 = vmatpush1.msra.mxu0 0.0
        %508 = vmatprep.subr.mxu0 0.0
        %509 = vmatpush1.msra.mxu0 0.0
        %510 = vmatprep.subr.mxu0 0.0
        %511 = vmatpush1.msra.mxu0 0.0
        %512 = vmatprep.subr.mxu0 0.0
        %513 = vmatpush1.msra.mxu0 0.0
        %514 = vmatprep.subr.mxu0 0.0
        %515 = vmatpush1.msra.mxu0 0.0
        %516 = vmatprep.subr.mxu0 0.0
        %517 = vmatpush1.msra.mxu0 %v478
        %518 = vmatprep.subr.mxu0 0.0
        %519 = vmatpush1.msra.mxu0 %v477
        %520 = vmatprep.subr.mxu0 0.0
        %521 = vmatpush1.msra.mxu0 %v476
        %522 = vmatprep.subr.mxu0 0.0
        %523 = vmatpush2.msra.mxu0 0.0
        %524 = vmatprep.subr.mxu0 0.0
        %525 = vmatpush2.msra.mxu0 0.0
        %526 = vmatprep.subr.mxu0 0.0
        %527 = vmatpush2.msra.mxu0 0.0
        %528 = vmatprep.subr.mxu0 0.0
        %529 = vmatpush2.msra.mxu0 0.0
        %530 = vmatprep.subr.mxu0 0.0
        %531 = vmatpush2.msra.mxu0 0.0
        %532 = vmatprep.subr.mxu0 0.0
        %533 = vmatpush2.msra.mxu0 0.0
        %534 = vmatprep.subr.mxu0 0.0
        %535 = vmatpush2.msra.mxu0 0.0
        %536 = vmatprep.subr.mxu0 0.0
        %537 = vmatpush2.msra.mxu0 0.0
        %538 = vmatprep.subr.mxu0 0.0
        %539 = vmatpush2.msra.mxu0 0.0
        %540 = vmatprep.subr.mxu0 0.0
        %541 = vmatpush2.msra.mxu0 0.0
        %542 = vmatprep.subr.mxu0 0.0
        %543 = vmatpush2.msra.mxu0 0.0
        %544 = vmatprep.subr.mxu0 0.0
        %545 = vmatpush2.msra.mxu0 0.0
        %546 = vmatprep.subr.mxu0 0.0
        %547 = vmatpush2.msra.mxu0 0.0
        %548 = vmatprep.subr.mxu0 0.0
        %549 = vmatpush2.msra.mxu0 0.0
        %550 = vmatprep.subr.mxu0 0.0
        %551 = vmatpush2.msra.mxu0 0.0
        %552 = vmatprep.subr.mxu0 0.0
        %553 = vmatpush2.msra.mxu0 0.0
        %554 = vmatprep.mubr.f32.mxu0 0.0
        %555 = vmatmul.mubr.f32.gmra.mxu0 %v488
        %v556 = vpop.f32.mrf.mxu0
        %v557 = vadd.f32 %v484, %v556
        %v558 = vpop.f32.mrf.mxu0
        %559 = vdwg.mxu0
        %vm560 = vcmp.ge.f32.partialorder %v557, 0.0
        %v561 = vmul.f32 %v557, 0.1
        %v562 = vsel %vm560, %v557, %v561
        %v563 = vadd.s32 %v467, 24
        %v564 = vadd.s32 %v468, 24
        %v565 = vadd.s32 %v469, 24
        %vm566 = vcmp.eq.s32.totalorder %v465, %v563
        %vm567 = vcmp.eq.s32.totalorder %v465, %v564
        %vm568 = vcmp.eq.s32.totalorder %v465, %v565
        %v569 = vsel %vm566, 1.0, 0.0
        %v570 = vsel %vm567, 1.0, 0.0
        %v571 = vsel %vm568, 1.0, 0.0
        %v573 = vsel %vm486, %v562, 0
        %575 = vmatprep.subr.mxu0 0.0
        %576 = vmatpush1.msra.mxu0 0.0
        %577 = vmatprep.subr.mxu0 0.0
        %578 = vmatpush1.msra.mxu0 0.0
        %579 = vmatprep.subr.mxu0 0.0
        %580 = vmatpush1.msra.mxu0 0.0
        %581 = vmatprep.subr.mxu0 0.0
        %582 = vmatpush1.msra.mxu0 0.0
        %583 = vmatprep.subr.mxu0 0.0
        %584 = vmatpush1.msra.mxu0 0.0
        %585 = vmatprep.subr.mxu0 0.0
        %586 = vmatpush1.msra.mxu0 0.0
        %587 = vmatprep.subr.mxu0 0.0
        %588 = vmatpush1.msra.mxu0 0.0
        %589 = vmatprep.subr.mxu0 0.0
        %590 = vmatpush1.msra.mxu0 0.0
        %591 = vmatprep.subr.mxu0 0.0
        %592 = vmatpush1.msra.mxu0 0.0
        %593 = vmatprep.subr.mxu0 0.0
        %594 = vmatpush1.msra.mxu0 0.0
        %595 = vmatprep.subr.mxu0 0.0
        %596 = vmatpush1.msra.mxu0 0.0
        %597 = vmatprep.subr.mxu0 0.0
        %598 = vmatpush1.msra.mxu0 0.0
        %599 = vmatprep.subr.mxu0 0.0
        %600 = vmatpush1.msra.mxu0 0.0
        %601 = vmatprep.subr.mxu0 0.0
        %602 = vmatpush1.msra.mxu0 %v571
        %603 = vmatprep.subr.mxu0 0.0
        %604 = vmatpush1.msra.mxu0 %v570
        %605 = vmatprep.subr.mxu0 0.0
        %606 = vmatpush1.msra.mxu0 %v569
        %607 = vmatprep.subr.mxu0 0.0
        %608 = vmatpush2.msra.mxu0 0.0
        %609 = vmatprep.subr.mxu0 0.0
        %610 = vmatpush2.msra.mxu0 0.0
        %611 = vmatprep.subr.mxu0 0.0
        %612 = vmatpush2.msra.mxu0 0.0
        %613 = vmatprep.subr.mxu0 0.0
        %614 = vmatpush2.msra.mxu0 0.0
        %615 = vmatprep.subr.mxu0 0.0
        %616 = vmatpush2.msra.mxu0 0.0
        %617 = vmatprep.subr.mxu0 0.0
        %618 = vmatpush2.msra.mxu0 0.0
        %619 = vmatprep.subr.mxu0 0.0
        %620 = vmatpush2.msra.mxu0 0.0
        %621 = vmatprep.subr.mxu0 0.0
        %622 = vmatpush2.msra.mxu0 0.0
        %623 = vmatprep.subr.mxu0 0.0
        %624 = vmatpush2.msra.mxu0 0.0
        %625 = vmatprep.subr.mxu0 0.0
        %626 = vmatpush2.msra.mxu0 0.0
        %627 = vmatprep.subr.mxu0 0.0
        %628 = vmatpush2.msra.mxu0 0.0
        %629 = vmatprep.subr.mxu0 0.0
        %630 = vmatpush2.msra.mxu0 0.0
        %631 = vmatprep.subr.mxu0 0.0
        %632 = vmatpush2.msra.mxu0 0.0
        %633 = vmatprep.subr.mxu0 0.0
        %634 = vmatpush2.msra.mxu0 0.0
        %635 = vmatprep.subr.mxu0 0.0
        %636 = vmatpush2.msra.mxu0 0.0
        %637 = vmatprep.subr.mxu0 0.0
        %638 = vmatpush2.msra.mxu0 0.0
        %639 = vmatprep.mubr.f32.mxu0 0.0
        %640 = vmatmul.mubr.f32.gmra.mxu0 %v573
        %v641 = vpop.f32.mrf.mxu0
        %v642 = vadd.f32 0.0, %v641
        %v643 = vpop.f32.mrf.mxu0
        %644 = vdwg.mxu0
        %645 = vmatprep.subr.mxu0 0.0
        %646 = vmatpush1.msra.mxu0 0.0
        %647 = vmatprep.subr.mxu0 0.0
        %648 = vmatpush1.msra.mxu0 0.0
        %649 = vmatprep.subr.mxu0 0.0
        %650 = vmatpush1.msra.mxu0 0.0
        %651 = vmatprep.subr.mxu0 0.0
        %652 = vmatpush1.msra.mxu0 0.0
        %653 = vmatprep.subr.mxu0 0.0
        %654 = vmatpush1.msra.mxu0 0.0
        %655 = vmatprep.subr.mxu0 0.0
        %656 = vmatpush1.msra.mxu0 0.0
        %657 = vmatprep.subr.mxu0 0.0
        %658 = vmatpush1.msra.mxu0 0.0
        %659 = vmatprep.subr.mxu0 0.0
        %660 = vmatpush1.msra.mxu0 0.0
        %661 = vmatprep.subr.mxu0 0.0
        %662 = vmatpush1.msra.mxu0 0.0
        %663 = vmatprep.subr.mxu0 0.0
        %664 = vmatpush1.msra.mxu0 0.0
        %665 = vmatprep.subr.mxu0 0.0
        %666 = vmatpush1.msra.mxu0 0.0
        %667 = vmatprep.subr.mxu0 0.0
        %668 = vmatpush1.msra.mxu0 0.0
        %669 = vmatprep.subr.mxu0 0.0
        %670 = vmatpush1.msra.mxu0 0.0
        %671 = vmatprep.subr.mxu0 0.0
        %672 = vmatpush1.msra.mxu0 %v475
        %673 = vmatprep.subr.mxu0 0.0
        %674 = vmatpush1.msra.mxu0 %v474
        %675 = vmatprep.subr.mxu0 0.0
        %676 = vmatpush1.msra.mxu0 %v473
        %677 = vmatprep.subr.mxu0 0.0
        %678 = vmatpush2.msra.mxu0 0.0
        %679 = vmatprep.subr.mxu0 0.0
        %680 = vmatpush2.msra.mxu0 0.0
        %681 = vmatprep.subr.mxu0 0.0
        %682 = vmatpush2.msra.mxu0 0.0
        %683 = vmatprep.subr.mxu0 0.0
        %684 = vmatpush2.msra.mxu0 0.0
        %685 = vmatprep.subr.mxu0 0.0
        %686 = vmatpush2.msra.mxu0 0.0
        %687 = vmatprep.subr.mxu0 0.0
        %688 = vmatpush2.msra.mxu0 0.0
        %689 = vmatprep.subr.mxu0 0.0
        %690 = vmatpush2.msra.mxu0 0.0
        %691 = vmatprep.subr.mxu0 0.0
        %692 = vmatpush2.msra.mxu0 0.0
        %693 = vmatprep.subr.mxu0 0.0
        %694 = vmatpush2.msra.mxu0 0.0
        %695 = vmatprep.subr.mxu0 0.0
        %696 = vmatpush2.msra.mxu0 0.0
        %697 = vmatprep.subr.mxu0 0.0
        %698 = vmatpush2.msra.mxu0 0.0
        %699 = vmatprep.subr.mxu0 0.0
        %700 = vmatpush2.msra.mxu0 0.0
        %701 = vmatprep.subr.mxu0 0.0
        %702 = vmatpush2.msra.mxu0 0.0
        %703 = vmatprep.subr.mxu0 0.0
        %704 = vmatpush2.msra.mxu0 0.0
        %705 = vmatprep.subr.mxu0 0.0
        %706 = vmatpush2.msra.mxu0 0.0
        %707 = vmatprep.subr.mxu0 0.0
        %708 = vmatpush2.msra.mxu0 0.0
        %709 = vmatprep.mubr.f32.mxu0 0.0
        %710 = vmatmul.mubr.f32.gmra.mxu0 %v488
        %v711 = vpop.f32.mrf.mxu0
        %v712 = vadd.f32 %v642, %v711
        %v713 = vpop.f32.mrf.mxu0
        %714 = vdwg.mxu0
        %v715 = vld [vmem:[#allocation7] sm:$0xff]
        %v716 = vld [vmem:[#allocation7 + $0x8] sm:$0xff]
        %v717 = vld [vmem:[#allocation7 + $0x10] sm:$0xff]
        %v718 = vld [vmem:[%s6] sm:$0x1]
        %v720 = vlaneseq
        %v721 = vshrl.u32 %v720, 7
        %v722 = vsub.s32 0, %v721
        %v723 = vrot.slane %v718, %v722
        %725 = vmatprep.subr.mxu0 0.0
        %726 = vmatpush1.msra.mxu0 0.0
        %727 = vmatprep.subr.mxu0 0.0
        %728 = vmatpush1.msra.mxu0 0.0
        %729 = vmatprep.subr.mxu0 0.0
        %730 = vmatpush1.msra.mxu0 0.0
        %731 = vmatprep.subr.mxu0 0.0
        %732 = vmatpush1.msra.mxu0 0.0
        %733 = vmatprep.subr.mxu0 0.0
        %734 = vmatpush1.msra.mxu0 0.0
        %735 = vmatprep.subr.mxu0 0.0
        %736 = vmatpush1.msra.mxu0 0.0
        %737 = vmatprep.subr.mxu0 0.0
        %738 = vmatpush1.msra.mxu0 0.0
        %739 = vmatprep.subr.mxu0 0.0
        %740 = vmatpush1.msra.mxu0 0.0
        %741 = vmatprep.subr.mxu0 0.0
        %742 = vmatpush1.msra.mxu0 0.0
        %743 = vmatprep.subr.mxu0 0.0
        %744 = vmatpush1.msra.mxu0 0.0
        %745 = vmatprep.subr.mxu0 0.0
        %746 = vmatpush1.msra.mxu0 0.0
        %747 = vmatprep.subr.mxu0 0.0
        %748 = vmatpush1.msra.mxu0 0.0
        %749 = vmatprep.subr.mxu0 0.0
        %750 = vmatpush1.msra.mxu0 0.0
        %751 = vmatprep.subr.mxu0 0.0
        %752 = vmatpush1.msra.mxu0 %v717
        %753 = vmatprep.subr.mxu0 0.0
        %754 = vmatpush1.msra.mxu0 %v716
        %755 = vmatprep.subr.mxu0 0.0
        %756 = vmatpush1.msra.mxu0 %v715
        %757 = vmatprep.subr.mxu0 0.0
        %758 = vmatpush2.msra.mxu0 0.0
        %759 = vmatprep.subr.mxu0 0.0
        %760 = vmatpush2.msra.mxu0 0.0
        %761 = vmatprep.subr.mxu0 0.0
        %762 = vmatpush2.msra.mxu0 0.0
        %763 = vmatprep.subr.mxu0 0.0
        %764 = vmatpush2.msra.mxu0 0.0
        %765 = vmatprep.subr.mxu0 0.0
        %766 = vmatpush2.msra.mxu0 0.0
        %767 = vmatprep.subr.mxu0 0.0
        %768 = vmatpush2.msra.mxu0 0.0
        %769 = vmatprep.subr.mxu0 0.0
        %770 = vmatpush2.msra.mxu0 0.0
        %771 = vmatprep.subr.mxu0 0.0
        %772 = vmatpush2.msra.mxu0 0.0
        %773 = vmatprep.subr.mxu0 0.0
        %774 = vmatpush2.msra.mxu0 0.0
        %775 = vmatprep.subr.mxu0 0.0
        %776 = vmatpush2.msra.mxu0 0.0
        %777 = vmatprep.subr.mxu0 0.0
        %778 = vmatpush2.msra.mxu0 0.0
        %779 = vmatprep.subr.mxu0 0.0
        %780 = vmatpush2.msra.mxu0 0.0
        %781 = vmatprep.subr.mxu0 0.0
        %782 = vmatpush2.msra.mxu0 0.0
        %783 = vmatprep.subr.mxu0 0.0
        %784 = vmatpush2.msra.mxu0 0.0
        %785 = vmatprep.subr.mxu0 0.0
        %786 = vmatpush2.msra.mxu0 0.0
        %787 = vmatprep.subr.mxu0 0.0
        %788 = vmatpush2.msra.mxu0 0.0
        %789 = vmatprep.mubr.f32.mxu0 0.0
        %790 = vmatmul.mubr.f32.gmra.mxu0 %v573
        %v791 = vpop.f32.mrf.mxu0
        %v792 = vadd.f32 %v723, %v791
        %v793 = vpop.f32.mrf.mxu0
        %794 = vdwg.mxu0
        %vm795 = vcmp.ge.f32.partialorder %v792, 0.0
        %v796 = vmul.f32 %v792, 0.1
        %v797 = vsel %vm795, %v792, %v796
        %v798 = vadd.s32 %v467, 48
        %v799 = vadd.s32 %v468, 48
        %v800 = vadd.s32 %v469, 48
        %vm801 = vcmp.eq.s32.totalorder %v465, %v798
        %vm802 = vcmp.eq.s32.totalorder %v465, %v799
        %vm803 = vcmp.eq.s32.totalorder %v465, %v800
        %v804 = vsel %vm801, 1.0, 0.0
        %v805 = vsel %vm802, 1.0, 0.0
        %v806 = vsel %vm803, 1.0, 0.0
        %v808 = vsel %vm486, %v797, 0
        %810 = vmatprep.subr.mxu0 0.0
        %811 = vmatpush1.msra.mxu0 0.0
        %812 = vmatprep.subr.mxu0 0.0
        %813 = vmatpush1.msra.mxu0 0.0
        %814 = vmatprep.subr.mxu0 0.0
        %815 = vmatpush1.msra.mxu0 0.0
        %816 = vmatprep.subr.mxu0 0.0
        %817 = vmatpush1.msra.mxu0 0.0
        %818 = vmatprep.subr.mxu0 0.0
        %819 = vmatpush1.msra.mxu0 0.0
        %820 = vmatprep.subr.mxu0 0.0
        %821 = vmatpush1.msra.mxu0 0.0
        %822 = vmatprep.subr.mxu0 0.0
        %823 = vmatpush1.msra.mxu0 0.0
        %824 = vmatprep.subr.mxu0 0.0
        %825 = vmatpush1.msra.mxu0 0.0
        %826 = vmatprep.subr.mxu0 0.0
        %827 = vmatpush1.msra.mxu0 0.0
        %828 = vmatprep.subr.mxu0 0.0
        %829 = vmatpush1.msra.mxu0 0.0
        %830 = vmatprep.subr.mxu0 0.0
        %831 = vmatpush1.msra.mxu0 0.0
        %832 = vmatprep.subr.mxu0 0.0
        %833 = vmatpush1.msra.mxu0 0.0
        %834 = vmatprep.subr.mxu0 0.0
        %835 = vmatpush1.msra.mxu0 0.0
        %836 = vmatprep.subr.mxu0 0.0
        %837 = vmatpush1.msra.mxu0 %v806
        %838 = vmatprep.subr.mxu0 0.0
        %839 = vmatpush1.msra.mxu0 %v805
        %840 = vmatprep.subr.mxu0 0.0
        %841 = vmatpush1.msra.mxu0 %v804
        %842 = vmatprep.subr.mxu0 0.0
        %843 = vmatpush2.msra.mxu0 0.0
        %844 = vmatprep.subr.mxu0 0.0
        %845 = vmatpush2.msra.mxu0 0.0
        %846 = vmatprep.subr.mxu0 0.0
        %847 = vmatpush2.msra.mxu0 0.0
        %848 = vmatprep.subr.mxu0 0.0
        %849 = vmatpush2.msra.mxu0 0.0
        %850 = vmatprep.subr.mxu0 0.0
        %851 = vmatpush2.msra.mxu0 0.0
        %852 = vmatprep.subr.mxu0 0.0
        %853 = vmatpush2.msra.mxu0 0.0
        %854 = vmatprep.subr.mxu0 0.0
        %855 = vmatpush2.msra.mxu0 0.0
        %856 = vmatprep.subr.mxu0 0.0
        %857 = vmatpush2.msra.mxu0 0.0
        %858 = vmatprep.subr.mxu0 0.0
        %859 = vmatpush2.msra.mxu0 0.0
        %860 = vmatprep.subr.mxu0 0.0
        %861 = vmatpush2.msra.mxu0 0.0
        %862 = vmatprep.subr.mxu0 0.0
        %863 = vmatpush2.msra.mxu0 0.0
        %864 = vmatprep.subr.mxu0 0.0
        %865 = vmatpush2.msra.mxu0 0.0
        %866 = vmatprep.subr.mxu0 0.0
        %867 = vmatpush2.msra.mxu0 0.0
        %868 = vmatprep.subr.mxu0 0.0
        %869 = vmatpush2.msra.mxu0 0.0
        %870 = vmatprep.subr.mxu0 0.0
        %871 = vmatpush2.msra.mxu0 0.0
        %872 = vmatprep.subr.mxu0 0.0
        %873 = vmatpush2.msra.mxu0 0.0
        %874 = vmatprep.mubr.f32.mxu0 0.0
        %875 = vmatmul.mubr.f32.gmra.mxu0 %v808
        %v876 = vpop.f32.mrf.mxu0
        %v877 = vadd.f32 0.0, %v876
        %v878 = vpop.f32.mrf.mxu0
        %879 = vdwg.mxu0
        %v880 = vadd.f32 %v712, %v877
        %v881 = vld [vmem:[%s7] sm:$0xff]
        %v882 = vld [vmem:[%s7 + $0x8] sm:$0xff]
        %v883 = vld [vmem:[%s7 + $0x10] sm:$0xff]
        %v884 = vld [vmem:[%s8] sm:$0x1]
        %v886 = vlaneseq
        %v887 = vshrl.u32 %v886, 7
        %v888 = vsub.s32 0, %v887
        %v889 = vrot.slane %v884, %v888
        %891 = vmatprep.subr.mxu0 0.0
        %892 = vmatpush1.msra.mxu0 0.0
        %893 = vmatprep.subr.mxu0 0.0
        %894 = vmatpush1.msra.mxu0 0.0
        %895 = vmatprep.subr.mxu0 0.0
        %896 = vmatpush1.msra.mxu0 0.0
        %897 = vmatprep.subr.mxu0 0.0
        %898 = vmatpush1.msra.mxu0 0.0
        %899 = vmatprep.subr.mxu0 0.0
        %900 = vmatpush1.msra.mxu0 0.0
        %901 = vmatprep.subr.mxu0 0.0
        %902 = vmatpush1.msra.mxu0 0.0
        %903 = vmatprep.subr.mxu0 0.0
        %904 = vmatpush1.msra.mxu0 0.0
        %905 = vmatprep.subr.mxu0 0.0
        %906 = vmatpush1.msra.mxu0 0.0
        %907 = vmatprep.subr.mxu0 0.0
        %908 = vmatpush1.msra.mxu0 0.0
        %909 = vmatprep.subr.mxu0 0.0
        %910 = vmatpush1.msra.mxu0 0.0
        %911 = vmatprep.subr.mxu0 0.0
        %912 = vmatpush1.msra.mxu0 0.0
        %913 = vmatprep.subr.mxu0 0.0
        %914 = vmatpush1.msra.mxu0 0.0
        %915 = vmatprep.subr.mxu0 0.0
        %916 = vmatpush1.msra.mxu0 0.0
        %917 = vmatprep.subr.mxu0 0.0
        %918 = vmatpush1.msra.mxu0 %v883
        %919 = vmatprep.subr.mxu0 0.0
        %920 = vmatpush1.msra.mxu0 %v882
        %921 = vmatprep.subr.mxu0 0.0
        %922 = vmatpush1.msra.mxu0 %v881
        %923 = vmatprep.subr.mxu0 0.0
        %924 = vmatpush2.msra.mxu0 0.0
        %925 = vmatprep.subr.mxu0 0.0
        %926 = vmatpush2.msra.mxu0 0.0
        %927 = vmatprep.subr.mxu0 0.0
        %928 = vmatpush2.msra.mxu0 0.0
        %929 = vmatprep.subr.mxu0 0.0
        %930 = vmatpush2.msra.mxu0 0.0
        %931 = vmatprep.subr.mxu0 0.0
        %932 = vmatpush2.msra.mxu0 0.0
        %933 = vmatprep.subr.mxu0 0.0
        %934 = vmatpush2.msra.mxu0 0.0
        %935 = vmatprep.subr.mxu0 0.0
        %936 = vmatpush2.msra.mxu0 0.0
        %937 = vmatprep.subr.mxu0 0.0
        %938 = vmatpush2.msra.mxu0 0.0
        %939 = vmatprep.subr.mxu0 0.0
        %940 = vmatpush2.msra.mxu0 0.0
        %941 = vmatprep.subr.mxu0 0.0
        %942 = vmatpush2.msra.mxu0 0.0
        %943 = vmatprep.subr.mxu0 0.0
        %944 = vmatpush2.msra.mxu0 0.0
        %945 = vmatprep.subr.mxu0 0.0
        %946 = vmatpush2.msra.mxu0 0.0
        %947 = vmatprep.subr.mxu0 0.0
        %948 = vmatpush2.msra.mxu0 0.0
        %949 = vmatprep.subr.mxu0 0.0
        %950 = vmatpush2.msra.mxu0 0.0
        %951 = vmatprep.subr.mxu0 0.0
        %952 = vmatpush2.msra.mxu0 0.0
        %953 = vmatprep.subr.mxu0 0.0
        %954 = vmatpush2.msra.mxu0 0.0
        %955 = vmatprep.mubr.f32.mxu0 0.0
        %956 = vmatmul.mubr.f32.gmra.mxu0 %v808
        %v957 = vpop.f32.mrf.mxu0
        %v958 = vadd.f32 %v889, %v957
        %v959 = vpop.f32.mrf.mxu0
        %960 = vdwg.mxu0
        %v961 = vadd.s32 %v467, 72
        %vm962 = vcmp.eq.s32.totalorder %v465, %v961
        %v963 = vsel %vm962, 1.0, 0.0
        %vm964 = vcmask 64512
        %v966 = vsel %vm964, %v958, 0
        %968 = vmatprep.subr.mxu0 0.0
        %969 = vmatpush1.msra.mxu0 0.0
        %970 = vmatprep.subr.mxu0 0.0
        %971 = vmatpush1.msra.mxu0 0.0
        %972 = vmatprep.subr.mxu0 0.0
        %973 = vmatpush1.msra.mxu0 0.0
        %974 = vmatprep.subr.mxu0 0.0
        %975 = vmatpush1.msra.mxu0 0.0
        %976 = vmatprep.subr.mxu0 0.0
        %977 = vmatpush1.msra.mxu0 0.0
        %978 = vmatprep.subr.mxu0 0.0
        %979 = vmatpush1.msra.mxu0 0.0
        %980 = vmatprep.subr.mxu0 0.0
        %981 = vmatpush1.msra.mxu0 0.0
        %982 = vmatprep.subr.mxu0 0.0
        %983 = vmatpush1.msra.mxu0 0.0
        %984 = vmatprep.subr.mxu0 0.0
        %985 = vmatpush1.msra.mxu0 0.0
        %986 = vmatprep.subr.mxu0 0.0
        %987 = vmatpush1.msra.mxu0 0.0
        %988 = vmatprep.subr.mxu0 0.0
        %989 = vmatpush1.msra.mxu0 0.0
        %990 = vmatprep.subr.mxu0 0.0
        %991 = vmatpush1.msra.mxu0 0.0
        %992 = vmatprep.subr.mxu0 0.0
        %993 = vmatpush1.msra.mxu0 0.0
        %994 = vmatprep.subr.mxu0 0.0
        %995 = vmatpush1.msra.mxu0 0.0
        %996 = vmatprep.subr.mxu0 0.0
        %997 = vmatpush1.msra.mxu0 0.0
        %998 = vmatprep.subr.mxu0 0.0
        %999 = vmatpush1.msra.mxu0 %v963
        %1000 = vmatprep.subr.mxu0 0.0
        %1001 = vmatpush2.msra.mxu0 0.0
        %1002 = vmatprep.subr.mxu0 0.0
        %1003 = vmatpush2.msra.mxu0 0.0
        %1004 = vmatprep.subr.mxu0 0.0
        %1005 = vmatpush2.msra.mxu0 0.0
        %1006 = vmatprep.subr.mxu0 0.0
        %1007 = vmatpush2.msra.mxu0 0.0
        %1008 = vmatprep.subr.mxu0 0.0
        %1009 = vmatpush2.msra.mxu0 0.0
        %1010 = vmatprep.subr.mxu0 0.0
        %1011 = vmatpush2.msra.mxu0 0.0
        %1012 = vmatprep.subr.mxu0 0.0
        %1013 = vmatpush2.msra.mxu0 0.0
        %1014 = vmatprep.subr.mxu0 0.0
        %1015 = vmatpush2.msra.mxu0 0.0
        %1016 = vmatprep.subr.mxu0 0.0
        %1017 = vmatpush2.msra.mxu0 0.0
        %1018 = vmatprep.subr.mxu0 0.0
        %1019 = vmatpush2.msra.mxu0 0.0
        %1020 = vmatprep.subr.mxu0 0.0
        %1021 = vmatpush2.msra.mxu0 0.0
        %1022 = vmatprep.subr.mxu0 0.0
        %1023 = vmatpush2.msra.mxu0 0.0
        %1024 = vmatprep.subr.mxu0 0.0
        %1025 = vmatpush2.msra.mxu0 0.0
        %1026 = vmatprep.subr.mxu0 0.0
        %1027 = vmatpush2.msra.mxu0 0.0
        %1028 = vmatprep.subr.mxu0 0.0
        %1029 = vmatpush2.msra.mxu0 0.0
        %1030 = vmatprep.subr.mxu0 0.0
        %1031 = vmatpush2.msra.mxu0 0.0
        %1032 = vmatprep.mubr.f32.mxu0 0.0
        %1033 = vmatmul.mubr.f32.gmra.mxu0 %v966
        %v1034 = vpop.f32.mrf.mxu0
        %v1035 = vadd.f32 0.0, %v1034
        %v1036 = vpop.f32.mrf.mxu0
        %1037 = vdwg.mxu0
        %v1038 = vadd.f32 %v880, %v1035
        %1039 = vst [vmem:[%s376] sm:$0xff] %v1038
        %s1040 = sand.u32 %s229, 1
        %s1041 = scalar_lea.sflag [#allocation4], %s1040
        %s1042 = sand.u32 %s229, 1
        %s1043 = smul.addr %s1042, 8
        %s1044 = scalar_lea.vmem [#allocation8], %s1043
        // Predicated region
        $region69: #{tpu_custom_call.1} parent=55 // pred_check
          %p1045 = pneg %p239
        $region70: #{tpu_custom_call.1} parent=55 // pred_check_branch
          %1047 = sbr.rel (%p1045) target = $region72
        $region71: #{tpu_custom_call.1} parent=55 // pred_region
          %s1049 = ssub.s32 128, 128
          %1050 = vsyncadd %s1041, %s1049
          %s1051 = smul.addr %s27, 128
          %s1052 = scalar_lea.hbm %s9, %s1051
          %s1054 = sshll.u32 %s1044, 4
          %s1055 = int_to_ptr.vmem [resolvable:$true] %s1054
          %1057 = dma.vmem_to_hbm [thread:$0]  %s1055, 128, %s1052, %s1041
        $region72: #{tpu_custom_call.1} parent=55 // pred_fallthru
          _
      $region56: #{tpu_custom_call.1} parent=5 // pred_fallthru
        _
      %p1058 = scmp.le.s32.totalorder 2, %s22
      // Predicated region
      $region73: #{tpu_custom_call.1} parent=5 // pred_check
        %p1059 = pneg %p1058
      $region74: #{tpu_custom_call.1} parent=5 // pred_check_branch
        %1061 = sbr.rel (%p1059) target = $region76
      $region75: #{tpu_custom_call.1} parent=5 // pred_region
        %s1062 = ssub.s32 %s22, 2
        // Predicated region
        $region77: #{tpu_custom_call.1} parent=75 // pred_check
          %p1063 = pneg %p245
        $region78: #{tpu_custom_call.1} parent=75 // pred_check_branch
          %1065 = sbr.rel (%p1063) target = $region80
        $region79: #{tpu_custom_call.1} parent=75 // pred_region
          %s1066 = sand.u32 %s230, 1
          %s1067 = scalar_lea.sflag [#allocation4], %s1066
          %s1068 = sand.u32 %s230, 1
          %s1069 = smul.addr %s1068, 8
          %s1070 = scalar_lea.vmem [#allocation8], %s1069
          %1071 = dma.done %s1067, 128
        $region80: #{tpu_custom_call.1} parent=75 // pred_fallthru
          _
      $region76: #{tpu_custom_call.1} parent=5 // pred_fallthru
        _
    $region6: #{tpu_custom_call.1} parent=1 // loop_footer
      %s26 = sadd.s32 1, %s22
    $region7: #{tpu_custom_call.1} parent=1 // loop_footer_branch
      %21 = sbr.rel target = $region3
    $region8: #{tpu_custom_call.1} parent=1 // loop_exit
      _
    %1072 = vsyncpa [#allocation3], 1
    %s1073 = scalar_lea.sflag [#allocation3], 1
    %1074 = vsyncpa %s1073, 1
    %1075 = vsyncpa [#allocation6], 1
    %1076 = vsyncpa [#allocation4], 1
    %s1077 = scalar_lea.sflag [#allocation4], 1
    %1078 = vsyncpa %s1077, 1

</llo_original>
